<compile_context>
chip_gen: v6e
topology: v6e:2x2x1
jax: 0.10.0
libtpu: 0.0.40
codegen_flags: <defaults>
</compile_context>

<pallas_src>
import jax
import jax.numpy as jnp
from jax.experimental import pallas as pl
from jax.experimental.pallas import tpu as pltpu

# ----- model configuration (consistent with nn.Linear(84, output_size)) ------
BATCH = 2
OUTPUT_SIZE = 2
IN_CHANNELS = 1
OUT_CHANNELS = 1            # required for the PyTorch forward to run (see above)
KERNEL_HEIGHTS = (3, 4, 5)
STRIDE = 1
PADDING = 0
VOCAB_SIZE = 50
EMBED = 32                  # embedding_length
NUM_SEQ = 31                # 3*31 - (3+4+5) + 3 = 84 -> matches Linear(84, ...)
FEAT_LENS = tuple(NUM_SEQ - kh + 1 for kh in KERNEL_HEIGHTS)   # (29, 28, 27)
FC_IN = sum(FEAT_LENS)                                          # 84

# ----- TPU-friendly padded sizes ----------------------------------------------
PAD_ID = VOCAB_SIZE         # extra all-zero embedding row (vocab 50 -> 51)
SEQ_PAD = 32                # 31 -> 32 so SEQ_PAD*EMBED == K_PAD exactly
B_PAD = 16                  # batch -> full bf16 (16,128) sublane tile for MXU LHS
K_REAL = NUM_SEQ * EMBED    # 992
K_PAD = SEQ_PAD * EMBED     # 1024 = 8*128, clean MXU K passes
N_PAD = 128                 # conv feature width 84 -> 128 (lane-dense)
OUT_PAD = 128               # logits 2 -> 128 (lane-dense output store)


# ------------------------------ Pallas kernel ---------------------------------
def cnn_kernel(x_ref, wc_ref, bc_ref, wf_ref, bf_ref, o_ref):
    """Hot path: conv-as-matmul + bias + ReLU (+ identity max-pool) + Linear.

    x_ref : (B_PAD, K_PAD)    f32   flattened embedded sentences (zero-padded)
    wc_ref: (K_PAD, N_PAD)    bf16  Toeplitz-unfolded conv weights (zero-padded)
    bc_ref: (1, N_PAD)        f32   per-position conv biases (zero-padded)
    wf_ref: (N_PAD, OUT_PAD)  bf16  FC weight, pre-transposed (zero-padded)
    bf_ref: (1, OUT_PAD)      f32   FC bias (zero-padded)
    o_ref : (B_PAD, OUT_PAD)  f32   padded logits (real part = [:B, :2])
    """
    # In-kernel bf16 cast (free VPU filler); MXU matmul with f32 accumulation.
    x_bf = x_ref[...].astype(jnp.bfloat16)
    conv = jnp.dot(x_bf, wc_ref[...], preferred_element_type=jnp.float32)
    # Bias + ReLU in f32 on the accumulator; max_pool1d(kernel=1) is identity.
    act = jnp.maximum(conv + bc_ref[...], 0.0)
    # TODO(synk): nn.Dropout is the identity in eval mode; not applied here.
    logits = jnp.dot(act.astype(jnp.bfloat16), wf_ref[...],
                     preferred_element_type=jnp.float32) + bf_ref[...]
    o_ref[...] = logits


def cnn_pallas_call(x_pad, w_conv_pad, b_conv_pad, w_fc_pad, b_fc_pad):
    vmem = pl.BlockSpec(memory_space=pltpu.MemorySpace.VMEM)
    cost = pl.CostEstimate(
        flops=2 * B_PAD * K_PAD * N_PAD + 2 * B_PAD * N_PAD * OUT_PAD,
        transcendentals=0,
        bytes_accessed=(x_pad.size * 4 + w_conv_pad.size * 2 + b_conv_pad.size * 4
                        + w_fc_pad.size * 2 + b_fc_pad.size * 4
                        + B_PAD * OUT_PAD * 4),
    )
    return pl.pallas_call(
        cnn_kernel,
        out_shape=jax.ShapeDtypeStruct((B_PAD, OUT_PAD), jnp.float32),
        in_specs=[vmem, vmem, vmem, vmem, vmem],
        out_specs=vmem,
        cost_estimate=cost,
    )(x_pad, w_conv_pad, b_conv_pad, w_fc_pad, b_fc_pad)


@jax.jit
def cnn_forward(tokens, emb_padded, w_conv_pad, b_conv_pad, w_fc_pad, b_fc_pad):
    """Full forward: token pad + embedding gather + Pallas kernel + slice.

    The pad token maps to an all-zero embedding row, so the gather directly
    produces the zero-padded (B_PAD, K_PAD) kernel input with no extra
    zeros/dynamic_update_slice/cast ops on the f32 activation path.
    """
    b = tokens.shape[0]
    tokens_pad = (jnp.full((B_PAD, SEQ_PAD), PAD_ID, jnp.int32)
                  .at[:b, :NUM_SEQ].set(tokens))
    x_pad = emb_padded[tokens_pad].reshape(B_PAD, K_PAD)           # (16, 1024) f32
    logits_pad = cnn_pallas_call(x_pad, w_conv_pad, b_conv_pad, w_fc_pad, b_fc_pad)
    return logits_pad[:b, :OUTPUT_SIZE]                            # (B, 2)


# ------------------------------ parameter glue ---------------------------------
def toeplitz_unfold(w, seq_len):
    """(kh, E) conv kernel -> (seq_len*E, H) matrix so that
    x.reshape(B, S*E) @ result == Conv2d(1,1,(kh,E),stride=1,pad=0) output."""
    kh, e = w.shape
    h_out = seq_len - kh + 1
    wt = jnp.zeros((seq_len, e, h_out), w.dtype)
    for h in range(h_out):
        wt = wt.at[h:h + kh, :, h].set(w)
    return wt.reshape(seq_len * e, h_out)


def prepare_params(emb_table, conv_ws, conv_bs, fc_w, fc_b):
    """Build padded, MXU-ready parameter tensors (done once, outside the kernel)."""
    # Embedding table with an extra all-zero "pad" row at index PAD_ID.
    emb_padded = jnp.concatenate(
        [emb_table, jnp.zeros((1, EMBED), emb_table.dtype)], axis=0)
    # Toeplitz-unfold and concatenate the three conv heads -> (992, 84).
    w_conv = jnp.concatenate([toeplitz_unfold(w, NUM_SEQ) for w in conv_ws], axis=1)
    w_conv_pad = (jnp.zeros((K_PAD, N_PAD), jnp.float32)
                  .at[:K_REAL, :FC_IN].set(w_conv)
                  .astype(jnp.bfloat16))
    # Per-head conv bias broadcast across that head's output positions -> (1, 84).
    b_conv = jnp.concatenate([jnp.full((1, h), b, jnp.float32)
                              for b, h in zip(conv_bs, FEAT_LENS)], axis=1)
    b_conv_pad = jnp.zeros((1, N_PAD), jnp.float32).at[:, :FC_IN].set(b_conv)
    # FC weight (pre-transposed) and bias, zero-padded so padded conv columns
    # and padded logit columns contribute exactly zero.
    w_fc_pad = (jnp.zeros((N_PAD, OUT_PAD), jnp.float32)
                .at[:FC_IN, :OUTPUT_SIZE].set(fc_w.T)
                .astype(jnp.bfloat16))
    b_fc_pad = jnp.zeros((1, OUT_PAD), jnp.float32).at[:, :OUTPUT_SIZE].set(fc_b)
    return emb_padded, w_conv_pad, b_conv_pad, w_fc_pad, b_fc_pad


def init_params(key):
    keys = jax.random.split(key, 9)
    emb_table = jax.random.normal(keys[0], (VOCAB_SIZE, EMBED), jnp.float32)
    conv_ws = [0.1 * jax.random.normal(keys[1 + i], (kh, EMBED), jnp.float32)
               for i, kh in enumerate(KERNEL_HEIGHTS)]
    conv_bs = [0.1 * jax.random.normal(keys[4 + i], (), jnp.float32)
               for i in range(3)]
    fc_w = 0.1 * jax.random.normal(keys[7], (OUTPUT_SIZE, FC_IN), jnp.float32)
    fc_b = 0.1 * jax.random.normal(keys[8], (OUTPUT_SIZE,), jnp.float32)
    return emb_table, conv_ws, conv_bs, fc_w, fc_b


def reference_forward(tokens, emb_table, conv_ws, conv_bs, fc_w, fc_b):
    """Plain-JAX f32 replica of the PyTorch forward (eval mode) for validation."""
    x = emb_table[tokens]                                   # (B, S, E)
    feats = []
    for w, b in zip(conv_ws, conv_bs):
        kh = w.shape[0]
        h_out = NUM_SEQ - kh + 1
        acc = b + sum(jnp.einsum('bse,e->bs', x[:, i:i + h_out, :], w[i])
                      for i in range(kh))
        feats.append(jax.nn.relu(acc))                      # pool(k=1) == identity
    all_out = jnp.concatenate(feats, axis=1)                # (B, 84)
    return all_out @ fc_w.T + fc_b                          # (B, OUT)


# ----------------------------------- main --------------------------------------
if __name__ == "__main__":
    key = jax.random.PRNGKey(0)
    pkey, tkey = jax.random.split(key)
    emb_table, conv_ws, conv_bs, fc_w, fc_b = init_params(pkey)

    # input_sentences: (batch_size, num_sequences) integer token ids
    tokens = jax.random.randint(tkey, (BATCH, NUM_SEQ), 0, VOCAB_SIZE, jnp.int32)

    emb_padded, w_conv_pad, b_conv_pad, w_fc_pad, b_fc_pad = prepare_params(
        emb_table, conv_ws, conv_bs, fc_w, fc_b)

    logits = cnn_forward(tokens, emb_padded, w_conv_pad, b_conv_pad,
                         w_fc_pad, b_fc_pad)
    logits = jax.block_until_ready(logits)

    ref = reference_forward(tokens, emb_table, conv_ws, conv_bs, fc_w, fc_b)
    assert logits.shape == (BATCH, OUTPUT_SIZE)
    # bf16 MXU inputs with f32 accumulation: loosen tolerance vs the f32 reference.
    assert jnp.allclose(logits, ref, atol=5e-2, rtol=5e-2)

    print("KERNEL_OK")
</pallas_src>

<mosaic_0001>
module attributes {stable_mosaic.version = 11 : i64} {
  func.func @cnn_kernel(%arg0: memref<16x1024xf32, #tpu.memory_space<vmem>>, %arg1: memref<1024x128xbf16, #tpu.memory_space<vmem>>, %arg2: memref<1x128xf32, #tpu.memory_space<vmem>>, %arg3: memref<128x128xbf16, #tpu.memory_space<vmem>>, %arg4: memref<1x128xf32, #tpu.memory_space<vmem>>, %arg5: memref<16x128xf32, #tpu.memory_space<vmem>>) attributes {dimension_semantics = [], scalar_prefetch = 0 : i64, scratch_operands = 0 : i64, tpu.core_type = #tpu.core_type<tc>} {
    %c0 = arith.constant 0 : index
    %c0_0 = arith.constant 0 : index
    %0 = vector.load %arg0[%c0, %c0_0] : memref<16x1024xf32, #tpu.memory_space<vmem>>, vector<16x1024xf32>
    %1 = arith.truncf %0 : vector<16x1024xf32> to vector<16x1024xbf16>
    %c0_1 = arith.constant 0 : index
    %c0_2 = arith.constant 0 : index
    %2 = vector.load %arg1[%c0_1, %c0_2] : memref<1024x128xbf16, #tpu.memory_space<vmem>>, vector<1024x128xbf16>
    %cst = arith.constant dense<0.000000e+00> : vector<16x128xf32>
    %3 = tpu.matmul %1, %2, %cst {dimension_numbers = #tpu.dot_dimension_numbers<[1], [0], [0], [1], [0, 0, 1, 1], [], []>} : vector<16x1024xbf16>, vector<1024x128xbf16>, vector<16x128xf32> -> vector<16x128xf32>
    %c0_3 = arith.constant 0 : index
    %c0_4 = arith.constant 0 : index
    %4 = vector.load %arg2[%c0_3, %c0_4] : memref<1x128xf32, #tpu.memory_space<vmem>>, vector<1x128xf32>
    %5 = vector.broadcast %4 : vector<1x128xf32> to vector<16x128xf32>
    %6 = arith.addf %3, %5 : vector<16x128xf32>
    %cst_5 = arith.constant 0.000000e+00 : f32
    %7 = vector.broadcast %cst_5 : f32 to vector<16x128xf32>
    %8 = arith.maximumf %6, %7 : vector<16x128xf32>
    %9 = arith.truncf %8 : vector<16x128xf32> to vector<16x128xbf16>
    %c0_6 = arith.constant 0 : index
    %c0_7 = arith.constant 0 : index
    %10 = vector.load %arg3[%c0_6, %c0_7] : memref<128x128xbf16, #tpu.memory_space<vmem>>, vector<128x128xbf16>
    %cst_8 = arith.constant dense<0.000000e+00> : vector<16x128xf32>
    %11 = tpu.matmul %9, %10, %cst_8 {dimension_numbers = #tpu.dot_dimension_numbers<[1], [0], [0], [1], [0, 0, 1, 1], [], []>} : vector<16x128xbf16>, vector<128x128xbf16>, vector<16x128xf32> -> vector<16x128xf32>
    %c0_9 = arith.constant 0 : index
    %c0_10 = arith.constant 0 : index
    %12 = vector.load %arg4[%c0_9, %c0_10] : memref<1x128xf32, #tpu.memory_space<vmem>>, vector<1x128xf32>
    %13 = vector.broadcast %12 : vector<1x128xf32> to vector<16x128xf32>
    %14 = arith.addf %11, %13 : vector<16x128xf32>
    %c0_11 = arith.constant 0 : index
    %c0_12 = arith.constant 0 : index
    %15 = vector.load %arg5[%c0_11, %c0_12] : memref<16x128xf32, #tpu.memory_space<vmem>>, vector<16x128xf32>
    tpu.vector_store %arg5[%c0_11, %c0_12], %14 {strides = array<i32>} : memref<16x128xf32, #tpu.memory_space<vmem>>, vector<16x128xf32>,
    return
  }
}

</mosaic_0001>

<llo_original>
// kernel: cnn_forward.1
$region0: #{cnn_forward.1}
  #allocation0 [shape = 'u32[]', space=smem, size = 0x4, offset = 0x4, fixed_abs, tag = 'smem constant byte address 0x4 - core index']
  #allocation1 [shape = 'u32[144,128]{1,0:T(1,128)}', space=vmem, size = 0x12000, scoped, tag = 'internal scratch']
  %s0 = inlined_call_operand.vmem [shape: f32[16,1024], index: 0, kind: input, shape index: {}]
  %s1 = inlined_call_operand.vmem [shape: bf16[1024,128], index: 1, kind: input, shape index: {}]
  %s2 = inlined_call_operand.vmem [shape: f32[1,128], index: 2, kind: input, shape index: {}]
  %s3 = inlined_call_operand.vmem [shape: bf16[128,128], index: 3, kind: input, shape index: {}]
  %s4 = inlined_call_operand.vmem [shape: f32[1,128], index: 4, kind: input, shape index: {}]
  %s5 = inlined_call_operand.vmem [shape: f32[16,128], index: 5, kind: output, shape index: {}]
  %s6 = sld [smem:[#allocation0]]
  $region30: #{cnn_forward.1} parent=0
    _
  %s8 = ssub.s32 1, %s6
  %s9 = scalar_select 0, %s8, %s6
  // Predicated region
  $region2: #{cnn_forward.1} parent=0 // pred_check
    _
  $region3: #{cnn_forward.1} parent=0 // pred_check_branch
    %11 = sbr.rel (0) target = $region5
  $region4: #{cnn_forward.1} parent=0 // pred_region
    _
  $region5: #{cnn_forward.1} parent=0 // pred_fallthru
    _
  // Predicated region
  $region6: #{cnn_forward.1} parent=0 // pred_check
    _
  $region7: #{cnn_forward.1} parent=0 // pred_check_branch
    %13 = sbr.rel (0) target = $region9
  $region8: #{cnn_forward.1} parent=0 // pred_region
    _
  $region9: #{cnn_forward.1} parent=0 // pred_fallthru
    _
  // Predicated region
  $region10: #{cnn_forward.1} parent=0 // pred_check
    _
  $region11: #{cnn_forward.1} parent=0 // pred_check_branch
    %15 = sbr.rel (0) target = $region13
  $region12: #{cnn_forward.1} parent=0 // pred_region
    _
  $region13: #{cnn_forward.1} parent=0 // pred_fallthru
    _
  // Predicated region
  $region14: #{cnn_forward.1} parent=0 // pred_check
    _
  $region15: #{cnn_forward.1} parent=0 // pred_check_branch
    %17 = sbr.rel (0) target = $region17
  $region16: #{cnn_forward.1} parent=0 // pred_region
    _
  $region17: #{cnn_forward.1} parent=0 // pred_fallthru
    _
  // Predicated region
  $region18: #{cnn_forward.1} parent=0 // pred_check
    _
  $region19: #{cnn_forward.1} parent=0 // pred_check_branch
    %19 = sbr.rel (0) target = $region21
  $region20: #{cnn_forward.1} parent=0 // pred_region
    _
  $region21: #{cnn_forward.1} parent=0 // pred_fallthru
    _
  %v21 = vld [vmem:[%s0] sm:$0xff]
  %v22 = vld [vmem:[%s0 + $0x8] sm:$0xff]
  %v23 = vld [vmem:[%s0 + $0x10] sm:$0xff]
  %v24 = vld [vmem:[%s0 + $0x18] sm:$0xff]
  %v25 = vld [vmem:[%s0 + $0x20] sm:$0xff]
  %v26 = vld [vmem:[%s0 + $0x28] sm:$0xff]
  %v27 = vld [vmem:[%s0 + $0x30] sm:$0xff]
  %v28 = vld [vmem:[%s0 + $0x38] sm:$0xff]
  %v29 = vld [vmem:[%s0 + $0x40] sm:$0xff]
  %v30 = vld [vmem:[%s0 + $0x48] sm:$0xff]
  %v31 = vld [vmem:[%s0 + $0x50] sm:$0xff]
  %v32 = vld [vmem:[%s0 + $0x58] sm:$0xff]
  %v33 = vld [vmem:[%s0 + $0x60] sm:$0xff]
  %v34 = vld [vmem:[%s0 + $0x68] sm:$0xff]
  %v35 = vld [vmem:[%s0 + $0x70] sm:$0xff]
  %v36 = vld [vmem:[%s0 + $0x78] sm:$0xff]
  %v37 = vpack.c.bf16 %v29, %v21
  %v38 = vpack.c.bf16 %v30, %v22
  %v39 = vpack.c.bf16 %v31, %v23
  %v40 = vpack.c.bf16 %v32, %v24
  %v41 = vpack.c.bf16 %v33, %v25
  %v42 = vpack.c.bf16 %v34, %v26
  %v43 = vpack.c.bf16 %v35, %v27
  %v44 = vpack.c.bf16 %v36, %v28
  %v45 = vld [vmem:[%s1] sm:$0xf]
  %v46 = vld [vmem:[%s1 + $0x4] sm:$0xf]
  %v47 = vld [vmem:[%s1 + $0x8] sm:$0xf]
  %v48 = vld [vmem:[%s1 + $0xc] sm:$0xf]
  %v49 = vld [vmem:[%s1 + $0x10] sm:$0xf]
  %v50 = vld [vmem:[%s1 + $0x14] sm:$0xf]
  %v51 = vld [vmem:[%s1 + $0x18] sm:$0xf]
  %v52 = vld [vmem:[%s1 + $0x1c] sm:$0xf]
  %v53 = vld [vmem:[%s1 + $0x20] sm:$0xf]
  %v54 = vld [vmem:[%s1 + $0x24] sm:$0xf]
  %v55 = vld [vmem:[%s1 + $0x28] sm:$0xf]
  %v56 = vld [vmem:[%s1 + $0x2c] sm:$0xf]
  %v57 = vld [vmem:[%s1 + $0x30] sm:$0xf]
  %v58 = vld [vmem:[%s1 + $0x34] sm:$0xf]
  %v59 = vld [vmem:[%s1 + $0x38] sm:$0xf]
  %v60 = vld [vmem:[%s1 + $0x3c] sm:$0xf]
  %v61 = vld [vmem:[%s1 + $0x40] sm:$0xf]
  %v62 = vld [vmem:[%s1 + $0x44] sm:$0xf]
  %v63 = vld [vmem:[%s1 + $0x48] sm:$0xf]
  %v64 = vld [vmem:[%s1 + $0x4c] sm:$0xf]
  %v65 = vld [vmem:[%s1 + $0x50] sm:$0xf]
  %v66 = vld [vmem:[%s1 + $0x54] sm:$0xf]
  %v67 = vld [vmem:[%s1 + $0x58] sm:$0xf]
  %v68 = vld [vmem:[%s1 + $0x5c] sm:$0xf]
  %v69 = vld [vmem:[%s1 + $0x60] sm:$0xf]
  %v70 = vld [vmem:[%s1 + $0x64] sm:$0xf]
  %v71 = vld [vmem:[%s1 + $0x68] sm:$0xf]
  %v72 = vld [vmem:[%s1 + $0x6c] sm:$0xf]
  %v73 = vld [vmem:[%s1 + $0x70] sm:$0xf]
  %v74 = vld [vmem:[%s1 + $0x74] sm:$0xf]
  %v75 = vld [vmem:[%s1 + $0x78] sm:$0xf]
  %v76 = vld [vmem:[%s1 + $0x7c] sm:$0xf]
  %v77 = vld [vmem:[%s1 + $0x80] sm:$0xf]
  %v78 = vld [vmem:[%s1 + $0x84] sm:$0xf]
  %v79 = vld [vmem:[%s1 + $0x88] sm:$0xf]
  %v80 = vld [vmem:[%s1 + $0x8c] sm:$0xf]
  %v81 = vld [vmem:[%s1 + $0x90] sm:$0xf]
  %v82 = vld [vmem:[%s1 + $0x94] sm:$0xf]
  %v83 = vld [vmem:[%s1 + $0x98] sm:$0xf]
  %v84 = vld [vmem:[%s1 + $0x9c] sm:$0xf]
  %v85 = vld [vmem:[%s1 + $0xa0] sm:$0xf]
  %v86 = vld [vmem:[%s1 + $0xa4] sm:$0xf]
  %v87 = vld [vmem:[%s1 + $0xa8] sm:$0xf]
  %v88 = vld [vmem:[%s1 + $0xac] sm:$0xf]
  %v89 = vld [vmem:[%s1 + $0xb0] sm:$0xf]
  %v90 = vld [vmem:[%s1 + $0xb4] sm:$0xf]
  %v91 = vld [vmem:[%s1 + $0xb8] sm:$0xf]
  %v92 = vld [vmem:[%s1 + $0xbc] sm:$0xf]
  %v93 = vld [vmem:[%s1 + $0xc0] sm:$0xf]
  %v94 = vld [vmem:[%s1 + $0xc4] sm:$0xf]
  %v95 = vld [vmem:[%s1 + $0xc8] sm:$0xf]
  %v96 = vld [vmem:[%s1 + $0xcc] sm:$0xf]
  %v97 = vld [vmem:[%s1 + $0xd0] sm:$0xf]
  %v98 = vld [vmem:[%s1 + $0xd4] sm:$0xf]
  %v99 = vld [vmem:[%s1 + $0xd8] sm:$0xf]
  %v100 = vld [vmem:[%s1 + $0xdc] sm:$0xf]
  %v101 = vld [vmem:[%s1 + $0xe0] sm:$0xf]
  %v102 = vld [vmem:[%s1 + $0xe4] sm:$0xf]
  %v103 = vld [vmem:[%s1 + $0xe8] sm:$0xf]
  %v104 = vld [vmem:[%s1 + $0xec] sm:$0xf]
  %v105 = vld [vmem:[%s1 + $0xf0] sm:$0xf]
  %v106 = vld [vmem:[%s1 + $0xf4] sm:$0xf]
  %v107 = vld [vmem:[%s1 + $0xf8] sm:$0xf]
  %v108 = vld [vmem:[%s1 + $0xfc] sm:$0xf]
  %v109 = vld [vmem:[%s1 + $0x100] sm:$0xf]
  %v110 = vld [vmem:[%s1 + $0x104] sm:$0xf]
  %v111 = vld [vmem:[%s1 + $0x108] sm:$0xf]
  %v112 = vld [vmem:[%s1 + $0x10c] sm:$0xf]
  %v113 = vld [vmem:[%s1 + $0x110] sm:$0xf]
  %v114 = vld [vmem:[%s1 + $0x114] sm:$0xf]
  %v115 = vld [vmem:[%s1 + $0x118] sm:$0xf]
  %v116 = vld [vmem:[%s1 + $0x11c] sm:$0xf]
  %v117 = vld [vmem:[%s1 + $0x120] sm:$0xf]
  %v118 = vld [vmem:[%s1 + $0x124] sm:$0xf]
  %v119 = vld [vmem:[%s1 + $0x128] sm:$0xf]
  %v120 = vld [vmem:[%s1 + $0x12c] sm:$0xf]
  %v121 = vld [vmem:[%s1 + $0x130] sm:$0xf]
  %v122 = vld [vmem:[%s1 + $0x134] sm:$0xf]
  %v123 = vld [vmem:[%s1 + $0x138] sm:$0xf]
  %v124 = vld [vmem:[%s1 + $0x13c] sm:$0xf]
  %v125 = vld [vmem:[%s1 + $0x140] sm:$0xf]
  %v126 = vld [vmem:[%s1 + $0x144] sm:$0xf]
  %v127 = vld [vmem:[%s1 + $0x148] sm:$0xf]
  %v128 = vld [vmem:[%s1 + $0x14c] sm:$0xf]
  %v129 = vld [vmem:[%s1 + $0x150] sm:$0xf]
  %v130 = vld [vmem:[%s1 + $0x154] sm:$0xf]
  %v131 = vld [vmem:[%s1 + $0x158] sm:$0xf]
  %v132 = vld [vmem:[%s1 + $0x15c] sm:$0xf]
  %v133 = vld [vmem:[%s1 + $0x160] sm:$0xf]
  %v134 = vld [vmem:[%s1 + $0x164] sm:$0xf]
  %v135 = vld [vmem:[%s1 + $0x168] sm:$0xf]
  %v136 = vld [vmem:[%s1 + $0x16c] sm:$0xf]
  %v137 = vld [vmem:[%s1 + $0x170] sm:$0xf]
  %v138 = vld [vmem:[%s1 + $0x174] sm:$0xf]
  %v139 = vld [vmem:[%s1 + $0x178] sm:$0xf]
  %v140 = vld [vmem:[%s1 + $0x17c] sm:$0xf]
  %v141 = vld [vmem:[%s1 + $0x180] sm:$0xf]
  %v142 = vld [vmem:[%s1 + $0x184] sm:$0xf]
  %v143 = vld [vmem:[%s1 + $0x188] sm:$0xf]
  %v144 = vld [vmem:[%s1 + $0x18c] sm:$0xf]
  %v145 = vld [vmem:[%s1 + $0x190] sm:$0xf]
  %v146 = vld [vmem:[%s1 + $0x194] sm:$0xf]
  %v147 = vld [vmem:[%s1 + $0x198] sm:$0xf]
  %v148 = vld [vmem:[%s1 + $0x19c] sm:$0xf]
  %v149 = vld [vmem:[%s1 + $0x1a0] sm:$0xf]
  %v150 = vld [vmem:[%s1 + $0x1a4] sm:$0xf]
  %v151 = vld [vmem:[%s1 + $0x1a8] sm:$0xf]
  %v152 = vld [vmem:[%s1 + $0x1ac] sm:$0xf]
  %v153 = vld [vmem:[%s1 + $0x1b0] sm:$0xf]
  %v154 = vld [vmem:[%s1 + $0x1b4] sm:$0xf]
  %v155 = vld [vmem:[%s1 + $0x1b8] sm:$0xf]
  %v156 = vld [vmem:[%s1 + $0x1bc] sm:$0xf]
  %v157 = vld [vmem:[%s1 + $0x1c0] sm:$0xf]
  %v158 = vld [vmem:[%s1 + $0x1c4] sm:$0xf]
  %v159 = vld [vmem:[%s1 + $0x1c8] sm:$0xf]
  %v160 = vld [vmem:[%s1 + $0x1cc] sm:$0xf]
  %v161 = vld [vmem:[%s1 + $0x1d0] sm:$0xf]
  %v162 = vld [vmem:[%s1 + $0x1d4] sm:$0xf]
  %v163 = vld [vmem:[%s1 + $0x1d8] sm:$0xf]
  %v164 = vld [vmem:[%s1 + $0x1dc] sm:$0xf]
  %v165 = vld [vmem:[%s1 + $0x1e0] sm:$0xf]
  %v166 = vld [vmem:[%s1 + $0x1e4] sm:$0xf]
  %v167 = vld [vmem:[%s1 + $0x1e8] sm:$0xf]
  %v168 = vld [vmem:[%s1 + $0x1ec] sm:$0xf]
  %v169 = vld [vmem:[%s1 + $0x1f0] sm:$0xf]
  %v170 = vld [vmem:[%s1 + $0x1f4] sm:$0xf]
  %v171 = vld [vmem:[%s1 + $0x1f8] sm:$0xf]
  %v172 = vld [vmem:[%s1 + $0x1fc] sm:$0xf]
  %v173 = vld [vmem:[%s2] sm:$0x1]
  %v175 = vlaneseq
  %v176 = vshrl.u32 %v175, 7
  %v177 = vsub.s32 0, %v176
  %v178 = vrot.slane %v173, %v177
  %v308 = vunpack.c.l.b16 %v45
  %v309 = vunpack.c.l.b16 %v46
  %v310 = vunpack.c.l.b16 %v47
  %v311 = vunpack.c.l.b16 %v48
  %v312 = vunpack.c.l.b16 %v49
  %v313 = vunpack.c.l.b16 %v50
  %v314 = vunpack.c.l.b16 %v51
  %v315 = vunpack.c.l.b16 %v52
  %v316 = vunpack.c.l.b16 %v53
  %v317 = vunpack.c.l.b16 %v54
  %v318 = vunpack.c.l.b16 %v55
  %v319 = vunpack.c.l.b16 %v56
  %v320 = vunpack.c.l.b16 %v57
  %v321 = vunpack.c.l.b16 %v58
  %v322 = vunpack.c.l.b16 %v59
  %v323 = vunpack.c.l.b16 %v60
  %v324 = vunpack.c.l.b16 %v61
  %v325 = vunpack.c.l.b16 %v62
  %v326 = vunpack.c.l.b16 %v63
  %v327 = vunpack.c.l.b16 %v64
  %v328 = vunpack.c.l.b16 %v65
  %v329 = vunpack.c.l.b16 %v66
  %v330 = vunpack.c.l.b16 %v67
  %v331 = vunpack.c.l.b16 %v68
  %v332 = vunpack.c.l.b16 %v69
  %v333 = vunpack.c.l.b16 %v70
  %v334 = vunpack.c.l.b16 %v71
  %v335 = vunpack.c.l.b16 %v72
  %v336 = vunpack.c.l.b16 %v73
  %v337 = vunpack.c.l.b16 %v74
  %v338 = vunpack.c.l.b16 %v75
  %v339 = vunpack.c.l.b16 %v76
  %v340 = vunpack.c.l.b16 %v77
  %v341 = vunpack.c.l.b16 %v78
  %v342 = vunpack.c.l.b16 %v79
  %v343 = vunpack.c.l.b16 %v80
  %v344 = vunpack.c.l.b16 %v81
  %v345 = vunpack.c.l.b16 %v82
  %v346 = vunpack.c.l.b16 %v83
  %v347 = vunpack.c.l.b16 %v84
  %v348 = vunpack.c.l.b16 %v85
  %v349 = vunpack.c.l.b16 %v86
  %v350 = vunpack.c.l.b16 %v87
  %v351 = vunpack.c.l.b16 %v88
  %v352 = vunpack.c.l.b16 %v89
  %v353 = vunpack.c.l.b16 %v90
  %v354 = vunpack.c.l.b16 %v91
  %v355 = vunpack.c.l.b16 %v92
  %v356 = vunpack.c.l.b16 %v93
  %v357 = vunpack.c.l.b16 %v94
  %v358 = vunpack.c.l.b16 %v95
  %v359 = vunpack.c.l.b16 %v96
  %v360 = vunpack.c.l.b16 %v97
  %v361 = vunpack.c.l.b16 %v98
  %v362 = vunpack.c.l.b16 %v99
  %v363 = vunpack.c.l.b16 %v100
  %v364 = vunpack.c.l.b16 %v101
  %v365 = vunpack.c.l.b16 %v102
  %v366 = vunpack.c.l.b16 %v103
  %v367 = vunpack.c.l.b16 %v104
  %v368 = vunpack.c.l.b16 %v105
  %v369 = vunpack.c.l.b16 %v106
  %v370 = vunpack.c.l.b16 %v107
  %v371 = vunpack.c.l.b16 %v108
  %v372 = vunpack.c.l.b16 %v109
  %v373 = vunpack.c.l.b16 %v110
  %v374 = vunpack.c.l.b16 %v111
  %v375 = vunpack.c.l.b16 %v112
  %v376 = vunpack.c.l.b16 %v113
  %v377 = vunpack.c.l.b16 %v114
  %v378 = vunpack.c.l.b16 %v115
  %v379 = vunpack.c.l.b16 %v116
  %v380 = vunpack.c.l.b16 %v117
  %v381 = vunpack.c.l.b16 %v118
  %v382 = vunpack.c.l.b16 %v119
  %v383 = vunpack.c.l.b16 %v120
  %v384 = vunpack.c.l.b16 %v121
  %v385 = vunpack.c.l.b16 %v122
  %v386 = vunpack.c.l.b16 %v123
  %v387 = vunpack.c.l.b16 %v124
  %v388 = vunpack.c.l.b16 %v125
  %v389 = vunpack.c.l.b16 %v126
  %v390 = vunpack.c.l.b16 %v127
  %v391 = vunpack.c.l.b16 %v128
  %v392 = vunpack.c.l.b16 %v129
  %v393 = vunpack.c.l.b16 %v130
  %v394 = vunpack.c.l.b16 %v131
  %v395 = vunpack.c.l.b16 %v132
  %v396 = vunpack.c.l.b16 %v133
  %v397 = vunpack.c.l.b16 %v134
  %v398 = vunpack.c.l.b16 %v135
  %v399 = vunpack.c.l.b16 %v136
  %v400 = vunpack.c.l.b16 %v137
  %v401 = vunpack.c.l.b16 %v138
  %v402 = vunpack.c.l.b16 %v139
  %v403 = vunpack.c.l.b16 %v140
  %v404 = vunpack.c.l.b16 %v141
  %v405 = vunpack.c.l.b16 %v142
  %v406 = vunpack.c.l.b16 %v143
  %v407 = vunpack.c.l.b16 %v144
  %v408 = vunpack.c.l.b16 %v145
  %v409 = vunpack.c.l.b16 %v146
  %v410 = vunpack.c.l.b16 %v147
  %v411 = vunpack.c.l.b16 %v148
  %v412 = vunpack.c.l.b16 %v149
  %v413 = vunpack.c.l.b16 %v150
  %v414 = vunpack.c.l.b16 %v151
  %v415 = vunpack.c.l.b16 %v152
  %v416 = vunpack.c.l.b16 %v153
  %v417 = vunpack.c.l.b16 %v154
  %v418 = vunpack.c.l.b16 %v155
  %v419 = vunpack.c.l.b16 %v156
  %v420 = vunpack.c.l.b16 %v157
  %v421 = vunpack.c.l.b16 %v158
  %v422 = vunpack.c.l.b16 %v159
  %v423 = vunpack.c.l.b16 %v160
  %v424 = vunpack.c.l.b16 %v161
  %v425 = vunpack.c.l.b16 %v162
  %v426 = vunpack.c.l.b16 %v163
  %v427 = vunpack.c.l.b16 %v164
  %v428 = vunpack.c.l.b16 %v165
  %v429 = vunpack.c.l.b16 %v166
  %v430 = vunpack.c.l.b16 %v167
  %v431 = vunpack.c.l.b16 %v168
  %v432 = vunpack.c.l.b16 %v169
  %v433 = vunpack.c.l.b16 %v170
  %v434 = vunpack.c.l.b16 %v171
  %v435 = vunpack.c.l.b16 %v172
  %v436 = vpack.c.b16 %v309, %v308
  %v437 = vpack.c.b16 %v311, %v310
  %v438 = vpack.c.b16 %v313, %v312
  %v439 = vpack.c.b16 %v315, %v314
  %v440 = vpack.c.b16 %v317, %v316
  %v441 = vpack.c.b16 %v319, %v318
  %v442 = vpack.c.b16 %v321, %v320
  %v443 = vpack.c.b16 %v323, %v322
  %v444 = vpack.c.b16 %v325, %v324
  %v445 = vpack.c.b16 %v327, %v326
  %v446 = vpack.c.b16 %v329, %v328
  %v447 = vpack.c.b16 %v331, %v330
  %v448 = vpack.c.b16 %v333, %v332
  %v449 = vpack.c.b16 %v335, %v334
  %v450 = vpack.c.b16 %v337, %v336
  %v451 = vpack.c.b16 %v339, %v338
  %v452 = vpack.c.b16 %v341, %v340
  %v453 = vpack.c.b16 %v343, %v342
  %v454 = vpack.c.b16 %v345, %v344
  %v455 = vpack.c.b16 %v347, %v346
  %v456 = vpack.c.b16 %v349, %v348
  %v457 = vpack.c.b16 %v351, %v350
  %v458 = vpack.c.b16 %v353, %v352
  %v459 = vpack.c.b16 %v355, %v354
  %v460 = vpack.c.b16 %v357, %v356
  %v461 = vpack.c.b16 %v359, %v358
  %v462 = vpack.c.b16 %v361, %v360
  %v463 = vpack.c.b16 %v363, %v362
  %v464 = vpack.c.b16 %v365, %v364
  %v465 = vpack.c.b16 %v367, %v366
  %v466 = vpack.c.b16 %v369, %v368
  %v467 = vpack.c.b16 %v371, %v370
  %v468 = vpack.c.b16 %v373, %v372
  %v469 = vpack.c.b16 %v375, %v374
  %v470 = vpack.c.b16 %v377, %v376
  %v471 = vpack.c.b16 %v379, %v378
  %v472 = vpack.c.b16 %v381, %v380
  %v473 = vpack.c.b16 %v383, %v382
  %v474 = vpack.c.b16 %v385, %v384
  %v475 = vpack.c.b16 %v387, %v386
  %v476 = vpack.c.b16 %v389, %v388
  %v477 = vpack.c.b16 %v391, %v390
  %v478 = vpack.c.b16 %v393, %v392
  %v479 = vpack.c.b16 %v395, %v394
  %v480 = vpack.c.b16 %v397, %v396
  %v481 = vpack.c.b16 %v399, %v398
  %v482 = vpack.c.b16 %v401, %v400
  %v483 = vpack.c.b16 %v403, %v402
  %v484 = vpack.c.b16 %v405, %v404
  %v485 = vpack.c.b16 %v407, %v406
  %v486 = vpack.c.b16 %v409, %v408
  %v487 = vpack.c.b16 %v411, %v410
  %v488 = vpack.c.b16 %v413, %v412
  %v489 = vpack.c.b16 %v415, %v414
  %v490 = vpack.c.b16 %v417, %v416
  %v491 = vpack.c.b16 %v419, %v418
  %v492 = vpack.c.b16 %v421, %v420
  %v493 = vpack.c.b16 %v423, %v422
  %v494 = vpack.c.b16 %v425, %v424
  %v495 = vpack.c.b16 %v427, %v426
  %v496 = vpack.c.b16 %v429, %v428
  %v497 = vpack.c.b16 %v431, %v430
  %v498 = vpack.c.b16 %v433, %v432
  %v499 = vpack.c.b16 %v435, %v434
  %564 = vmatprep.subr.bf16.mxu0 0
  %565 = vmatpush1.bf16.msra.mxu0 %v443
  %566 = vmatprep.subr.bf16.mxu0 0
  %567 = vmatpush1.bf16.msra.mxu0 %v442
  %568 = vmatprep.subr.bf16.mxu0 0
  %569 = vmatpush1.bf16.msra.mxu0 %v441
  %570 = vmatprep.subr.bf16.mxu0 0
  %571 = vmatpush1.bf16.msra.mxu0 %v440
  %572 = vmatprep.subr.bf16.mxu0 0
  %573 = vmatpush1.bf16.msra.mxu0 %v439
  %574 = vmatprep.subr.bf16.mxu0 0
  %575 = vmatpush1.bf16.msra.mxu0 %v438
  %576 = vmatprep.subr.bf16.mxu0 0
  %577 = vmatpush1.bf16.msra.mxu0 %v437
  %578 = vmatprep.subr.bf16.mxu0 0
  %579 = vmatpush1.bf16.msra.mxu0 %v436
  %580 = vmatprep.subr.bf16.mxu0 0
  %581 = vmatpush2.bf16.msra.mxu0 %v451
  %582 = vmatprep.subr.bf16.mxu0 0
  %583 = vmatpush2.bf16.msra.mxu0 %v450
  %584 = vmatprep.subr.bf16.mxu0 0
  %585 = vmatpush2.bf16.msra.mxu0 %v449
  %586 = vmatprep.subr.bf16.mxu0 0
  %587 = vmatpush2.bf16.msra.mxu0 %v448
  %588 = vmatprep.subr.bf16.mxu0 0
  %589 = vmatpush2.bf16.msra.mxu0 %v447
  %590 = vmatprep.subr.bf16.mxu0 0
  %591 = vmatpush2.bf16.msra.mxu0 %v446
  %592 = vmatprep.subr.bf16.mxu0 0
  %593 = vmatpush2.bf16.msra.mxu0 %v445
  %594 = vmatprep.subr.bf16.mxu0 0
  %595 = vmatpush2.bf16.msra.mxu0 %v444
  %596 = vmatprep.mubr.bf16.mxu0 %v38
  %597 = vmatmul.mubr.bf16.gmra.mxu0 %v37
  %v598 = vpop.f32.mrf.mxu0
  %v599 = vadd.f32 %v178, %v598
  %v600 = vpop.f32.mrf.mxu0
  %v601 = vpop.f32.mrf.mxu0
  %v602 = vadd.f32 %v178, %v601
  %v603 = vpop.f32.mrf.mxu0
  %604 = vdwg.mxu0
  %605 = vmatprep.subr.bf16.mxu0 0
  %606 = vmatpush1.bf16.msra.mxu0 %v459
  %607 = vmatprep.subr.bf16.mxu0 0
  %608 = vmatpush1.bf16.msra.mxu0 %v458
  %609 = vmatprep.subr.bf16.mxu0 0
  %610 = vmatpush1.bf16.msra.mxu0 %v457
  %611 = vmatprep.subr.bf16.mxu0 0
  %612 = vmatpush1.bf16.msra.mxu0 %v456
  %613 = vmatprep.subr.bf16.mxu0 0
  %614 = vmatpush1.bf16.msra.mxu0 %v455
  %615 = vmatprep.subr.bf16.mxu0 0
  %616 = vmatpush1.bf16.msra.mxu0 %v454
  %617 = vmatprep.subr.bf16.mxu0 0
  %618 = vmatpush1.bf16.msra.mxu0 %v453
  %619 = vmatprep.subr.bf16.mxu0 0
  %620 = vmatpush1.bf16.msra.mxu0 %v452
  %621 = vmatprep.subr.bf16.mxu0 0
  %622 = vmatpush2.bf16.msra.mxu0 %v467
  %623 = vmatprep.subr.bf16.mxu0 0
  %624 = vmatpush2.bf16.msra.mxu0 %v466
  %625 = vmatprep.subr.bf16.mxu0 0
  %626 = vmatpush2.bf16.msra.mxu0 %v465
  %627 = vmatprep.subr.bf16.mxu0 0
  %628 = vmatpush2.bf16.msra.mxu0 %v464
  %629 = vmatprep.subr.bf16.mxu0 0
  %630 = vmatpush2.bf16.msra.mxu0 %v463
  %631 = vmatprep.subr.bf16.mxu0 0
  %632 = vmatpush2.bf16.msra.mxu0 %v462
  %633 = vmatprep.subr.bf16.mxu0 0
  %634 = vmatpush2.bf16.msra.mxu0 %v461
  %635 = vmatprep.subr.bf16.mxu0 0
  %636 = vmatpush2.bf16.msra.mxu0 %v460
  %637 = vmatprep.mubr.bf16.mxu0 %v40
  %638 = vmatmul.mubr.bf16.gmra.mxu0 %v39
  %v639 = vpop.f32.mrf.mxu0
  %v640 = vadd.f32 %v599, %v639
  %v641 = vpop.f32.mrf.mxu0
  %v642 = vpop.f32.mrf.mxu0
  %v643 = vadd.f32 %v602, %v642
  %v644 = vpop.f32.mrf.mxu0
  %645 = vdwg.mxu0
  %646 = vmatprep.subr.bf16.mxu0 0
  %647 = vmatpush1.bf16.msra.mxu0 %v475
  %648 = vmatprep.subr.bf16.mxu0 0
  %649 = vmatpush1.bf16.msra.mxu0 %v474
  %650 = vmatprep.subr.bf16.mxu0 0
  %651 = vmatpush1.bf16.msra.mxu0 %v473
  %652 = vmatprep.subr.bf16.mxu0 0
  %653 = vmatpush1.bf16.msra.mxu0 %v472
  %654 = vmatprep.subr.bf16.mxu0 0
  %655 = vmatpush1.bf16.msra.mxu0 %v471
  %656 = vmatprep.subr.bf16.mxu0 0
  %657 = vmatpush1.bf16.msra.mxu0 %v470
  %658 = vmatprep.subr.bf16.mxu0 0
  %659 = vmatpush1.bf16.msra.mxu0 %v469
  %660 = vmatprep.subr.bf16.mxu0 0
  %661 = vmatpush1.bf16.msra.mxu0 %v468
  %662 = vmatprep.subr.bf16.mxu0 0
  %663 = vmatpush2.bf16.msra.mxu0 %v483
  %664 = vmatprep.subr.bf16.mxu0 0
  %665 = vmatpush2.bf16.msra.mxu0 %v482
  %666 = vmatprep.subr.bf16.mxu0 0
  %667 = vmatpush2.bf16.msra.mxu0 %v481
  %668 = vmatprep.subr.bf16.mxu0 0
  %669 = vmatpush2.bf16.msra.mxu0 %v480
  %670 = vmatprep.subr.bf16.mxu0 0
  %671 = vmatpush2.bf16.msra.mxu0 %v479
  %672 = vmatprep.subr.bf16.mxu0 0
  %673 = vmatpush2.bf16.msra.mxu0 %v478
  %674 = vmatprep.subr.bf16.mxu0 0
  %675 = vmatpush2.bf16.msra.mxu0 %v477
  %676 = vmatprep.subr.bf16.mxu0 0
  %677 = vmatpush2.bf16.msra.mxu0 %v476
  %678 = vmatprep.mubr.bf16.mxu0 %v42
  %679 = vmatmul.mubr.bf16.gmra.mxu0 %v41
  %v680 = vpop.f32.mrf.mxu0
  %v681 = vadd.f32 %v640, %v680
  %v682 = vpop.f32.mrf.mxu0
  %v683 = vpop.f32.mrf.mxu0
  %v684 = vadd.f32 %v643, %v683
  %v685 = vpop.f32.mrf.mxu0
  %686 = vdwg.mxu0
  %687 = vmatprep.subr.bf16.mxu0 0
  %688 = vmatpush1.bf16.msra.mxu0 %v491
  %689 = vmatprep.subr.bf16.mxu0 0
  %690 = vmatpush1.bf16.msra.mxu0 %v490
  %691 = vmatprep.subr.bf16.mxu0 0
  %692 = vmatpush1.bf16.msra.mxu0 %v489
  %693 = vmatprep.subr.bf16.mxu0 0
  %694 = vmatpush1.bf16.msra.mxu0 %v488
  %695 = vmatprep.subr.bf16.mxu0 0
  %696 = vmatpush1.bf16.msra.mxu0 %v487
  %697 = vmatprep.subr.bf16.mxu0 0
  %698 = vmatpush1.bf16.msra.mxu0 %v486
  %699 = vmatprep.subr.bf16.mxu0 0
  %700 = vmatpush1.bf16.msra.mxu0 %v485
  %701 = vmatprep.subr.bf16.mxu0 0
  %702 = vmatpush1.bf16.msra.mxu0 %v484
  %703 = vmatprep.subr.bf16.mxu0 0
  %704 = vmatpush2.bf16.msra.mxu0 %v499
  %705 = vmatprep.subr.bf16.mxu0 0
  %706 = vmatpush2.bf16.msra.mxu0 %v498
  %707 = vmatprep.subr.bf16.mxu0 0
  %708 = vmatpush2.bf16.msra.mxu0 %v497
  %709 = vmatprep.subr.bf16.mxu0 0
  %710 = vmatpush2.bf16.msra.mxu0 %v496
  %711 = vmatprep.subr.bf16.mxu0 0
  %712 = vmatpush2.bf16.msra.mxu0 %v495
  %713 = vmatprep.subr.bf16.mxu0 0
  %714 = vmatpush2.bf16.msra.mxu0 %v494
  %715 = vmatprep.subr.bf16.mxu0 0
  %716 = vmatpush2.bf16.msra.mxu0 %v493
  %717 = vmatprep.subr.bf16.mxu0 0
  %718 = vmatpush2.bf16.msra.mxu0 %v492
  %719 = vmatprep.mubr.bf16.mxu0 %v44
  %720 = vmatmul.mubr.bf16.gmra.mxu0 %v43
  %v721 = vpop.f32.mrf.mxu0
  %v722 = vadd.f32 %v681, %v721
  %v723 = vpop.f32.mrf.mxu0
  %v724 = vpop.f32.mrf.mxu0
  %v725 = vadd.f32 %v684, %v724
  %v726 = vpop.f32.mrf.mxu0
  %727 = vdwg.mxu0
  %v728 = vmax.f32 %v722, 0.0
  %v729 = vmax.f32 %v725, 0.0
  %v730 = vpack.c.bf16 %v729, %v728
  %v731 = vld [vmem:[%s3] sm:$0xf]
  %v732 = vld [vmem:[%s3 + $0x4] sm:$0xf]
  %v733 = vld [vmem:[%s3 + $0x8] sm:$0xf]
  %v734 = vld [vmem:[%s3 + $0xc] sm:$0xf]
  %v735 = vld [vmem:[%s3 + $0x10] sm:$0xf]
  %v736 = vld [vmem:[%s3 + $0x14] sm:$0xf]
  %v737 = vld [vmem:[%s3 + $0x18] sm:$0xf]
  %v738 = vld [vmem:[%s3 + $0x1c] sm:$0xf]
  %v739 = vld [vmem:[%s3 + $0x20] sm:$0xf]
  %v740 = vld [vmem:[%s3 + $0x24] sm:$0xf]
  %v741 = vld [vmem:[%s3 + $0x28] sm:$0xf]
  %v742 = vld [vmem:[%s3 + $0x2c] sm:$0xf]
  %v743 = vld [vmem:[%s3 + $0x30] sm:$0xf]
  %v744 = vld [vmem:[%s3 + $0x34] sm:$0xf]
  %v745 = vld [vmem:[%s3 + $0x38] sm:$0xf]
  %v746 = vld [vmem:[%s3 + $0x3c] sm:$0xf]
  %v747 = vld [vmem:[%s4] sm:$0x1]
  %v749 = vlaneseq
  %v750 = vshrl.u32 %v749, 7
  %v751 = vsub.s32 0, %v750
  %v752 = vrot.slane %v747, %v751
  %v770 = vunpack.c.l.b16 %v731
  %v771 = vunpack.c.l.b16 %v732
  %v772 = vunpack.c.l.b16 %v733
  %v773 = vunpack.c.l.b16 %v734
  %v774 = vunpack.c.l.b16 %v735
  %v775 = vunpack.c.l.b16 %v736
  %v776 = vunpack.c.l.b16 %v737
  %v777 = vunpack.c.l.b16 %v738
  %v778 = vunpack.c.l.b16 %v739
  %v779 = vunpack.c.l.b16 %v740
  %v780 = vunpack.c.l.b16 %v741
  %v781 = vunpack.c.l.b16 %v742
  %v782 = vunpack.c.l.b16 %v743
  %v783 = vunpack.c.l.b16 %v744
  %v784 = vunpack.c.l.b16 %v745
  %v785 = vunpack.c.l.b16 %v746
  %v786 = vpack.c.b16 %v771, %v770
  %v787 = vpack.c.b16 %v773, %v772
  %v788 = vpack.c.b16 %v775, %v774
  %v789 = vpack.c.b16 %v777, %v776
  %v790 = vpack.c.b16 %v779, %v778
  %v791 = vpack.c.b16 %v781, %v780
  %v792 = vpack.c.b16 %v783, %v782
  %v793 = vpack.c.b16 %v785, %v784
  %802 = vmatprep.subr.bf16.mxu0 0
  %803 = vmatpush1.bf16.msra.mxu0 %v793
  %804 = vmatprep.subr.bf16.mxu0 0
  %805 = vmatpush1.bf16.msra.mxu0 %v792
  %806 = vmatprep.subr.bf16.mxu0 0
  %807 = vmatpush1.bf16.msra.mxu0 %v791
  %808 = vmatprep.subr.bf16.mxu0 0
  %809 = vmatpush1.bf16.msra.mxu0 %v790
  %810 = vmatprep.subr.bf16.mxu0 0
  %811 = vmatpush1.bf16.msra.mxu0 %v789
  %812 = vmatprep.subr.bf16.mxu0 0
  %813 = vmatpush1.bf16.msra.mxu0 %v788
  %814 = vmatprep.subr.bf16.mxu0 0
  %815 = vmatpush1.bf16.msra.mxu0 %v787
  %816 = vmatprep.subr.bf16.mxu0 0
  %817 = vmatpush1.bf16.msra.mxu0 %v786
  %818 = vmatprep.subr.bf16.mxu0 0
  %819 = vmatpush2.bf16.msra.mxu0 0
  %820 = vmatprep.subr.bf16.mxu0 0
  %821 = vmatpush2.bf16.msra.mxu0 0
  %822 = vmatprep.subr.bf16.mxu0 0
  %823 = vmatpush2.bf16.msra.mxu0 0
  %824 = vmatprep.subr.bf16.mxu0 0
  %825 = vmatpush2.bf16.msra.mxu0 0
  %826 = vmatprep.subr.bf16.mxu0 0
  %827 = vmatpush2.bf16.msra.mxu0 0
  %828 = vmatprep.subr.bf16.mxu0 0
  %829 = vmatpush2.bf16.msra.mxu0 0
  %830 = vmatprep.subr.bf16.mxu0 0
  %831 = vmatpush2.bf16.msra.mxu0 0
  %832 = vmatprep.subr.bf16.mxu0 0
  %833 = vmatpush2.bf16.msra.mxu0 0
  %834 = vmatprep.mubr.bf16.mxu0 0
  %835 = vmatmul.mubr.bf16.gmra.mxu0 %v730
  %v836 = vpop.f32.mrf.mxu0
  %v837 = vadd.f32 %v752, %v836
  %v838 = vpop.f32.mrf.mxu0
  %v839 = vpop.f32.mrf.mxu0
  %v840 = vadd.f32 %v752, %v839
  %v841 = vpop.f32.mrf.mxu0
  %842 = vdwg.mxu0
  %843 = vst [vmem:[%s5] sm:$0xff] %v837
  %844 = vst [vmem:[%s5 + $0x8] sm:$0xff] %v840
  // Predicated region
  $region22: #{cnn_forward.1} parent=0 // pred_check
    _
  $region23: #{cnn_forward.1} parent=0 // pred_check_branch
    %846 = sbr.rel (0) target = $region25
  $region24: #{cnn_forward.1} parent=0 // pred_region
    _
  $region25: #{cnn_forward.1} parent=0 // pred_fallthru
    _
  // Predicated region
  $region26: #{cnn_forward.1} parent=0 // pred_check
    _
  $region27: #{cnn_forward.1} parent=0 // pred_check_branch
    %848 = sbr.rel (0) target = $region29
  $region28: #{cnn_forward.1} parent=0 // pred_region
    _
  $region29: #{cnn_forward.1} parent=0 // pred_fallthru
    _

</llo_original>
